<compile_context>
chip_gen: v7x
topology: tpu7x:2x2x1
jax: 0.10.0
libtpu: 0.0.40
codegen_flags: <defaults>
</compile_context>

<pallas_src>
import functools

import jax
import jax.numpy as jnp
from jax.experimental import pallas as pl
from jax.experimental.pallas import tpu as pltpu


def _mlp_kernel(x_ref,
                w1_ref, b1_ref,
                w2_ref, b2_ref,
                w3_ref, b3_ref,
                w4_ref, b4_ref,
                o_ref):
    """Fused 4x (matmul + bias + ReLU) on one (TB, in_size) batch tile.

    Weights arrive as bf16 (MXU-native), biases as f32 (1, N).  All dots
    accumulate in f32; the elementwise epilogue (bias + ReLU) is f32 on the VPU.
    """
    # Load biases once per grid step (they broadcast over the TB rows in `+`).
    b1 = b1_ref[...]
    b2 = b2_ref[...]
    b3 = b3_ref[...]
    b4 = b4_ref[...]

    h = x_ref[...].astype(jnp.bfloat16)

    h = jnp.dot(h, w1_ref[...], preferred_element_type=jnp.float32) + b1
    h = jnp.maximum(h, 0.0)

    h = jnp.dot(h.astype(jnp.bfloat16), w2_ref[...],
                preferred_element_type=jnp.float32) + b2
    h = jnp.maximum(h, 0.0)

    h = jnp.dot(h.astype(jnp.bfloat16), w3_ref[...],
                preferred_element_type=jnp.float32) + b3
    h = jnp.maximum(h, 0.0)

    h = jnp.dot(h.astype(jnp.bfloat16), w4_ref[...],
                preferred_element_type=jnp.float32) + b4
    h = jnp.maximum(h, 0.0)

    o_ref[...] = h.astype(o_ref.dtype)


def simple_dnn_forward(x, params, *, future_window, tb=256):
    """x: [B, past_window, in_units] -> [B, future_window, out_units]."""
    B = x.shape[0]
    x_flat = x.reshape(B, -1).astype(jnp.float32)          # flatten(1)
    in_size = x_flat.shape[1]

    (w1, b1), (w2, b2), (w3, b3), (w4, b4) = params
    out_size = w4.shape[1]

    # --- Lane-dense output: pad last layer to a multiple of 128 columns. ---
    out_pad = pl.cdiv(out_size, 128) * 128
    if out_pad != out_size:
        w4 = jnp.pad(w4, ((0, 0), (0, out_pad - out_size)))
        b4 = jnp.pad(b4, ((0, 0), (0, out_pad - out_size)))

    # bf16 weights (MXU-native, half the resident/DMA bytes); f32 biases.
    w1b, w2b, w3b, w4b = (w.astype(jnp.bfloat16) for w in (w1, w2, w3, w4))
    b1f, b2f, b3f, b4f = (b.astype(jnp.float32) for b in (b1, b2, b3, b4))

    # --- Batch tiling: TB multiple of 8 (f32 sublane); pad B up to grid. ---
    b_pad8 = pl.cdiv(B, 8) * 8
    TB = min(tb, b_pad8)
    B_pad = pl.cdiv(B, TB) * TB
    if B_pad != B:
        x_flat = jnp.pad(x_flat, ((0, B_pad - B), (0, 0)))

    grid = (B_pad // TB,)

    x_spec = pl.BlockSpec((TB, in_size), lambda i: (i, 0))
    out_spec = pl.BlockSpec((TB, out_pad), lambda i: (i, 0))
    # Constant index_map: weight/bias blocks stay resident in VMEM across steps.
    resident = lambda arr: pl.BlockSpec(arr.shape, lambda i: (0, 0))

    h1, h2, h3 = w1.shape[1], w2.shape[1], w3.shape[1]
    flops = 2 * B_pad * (in_size * h1 + h1 * h2 + h2 * h3 + h3 * out_pad)
    bytes_accessed = (
        B_pad * in_size * 4 + B_pad * out_pad * 4
        + sum(int(w.size) * 2 for w in (w1b, w2b, w3b, w4b))
        + sum(int(b.size) * 4 for b in (b1f, b2f, b3f, b4f)))

    out_flat = pl.pallas_call(
        _mlp_kernel,
        out_shape=jax.ShapeDtypeStruct((B_pad, out_pad), jnp.float32),
        grid=grid,
        in_specs=[
            x_spec,
            resident(w1b), resident(b1f),
            resident(w2b), resident(b2f),
            resident(w3b), resident(b3f),
            resident(w4b), resident(b4f),
        ],
        out_specs=out_spec,
        compiler_params=pltpu.CompilerParams(
            dimension_semantics=("parallel",)),
        cost_estimate=pl.CostEstimate(
            flops=flops, transcendentals=0, bytes_accessed=bytes_accessed),
    )(x_flat, w1b, b1f, w2b, b2f, w3b, b3f, w4b, b4f)

    out = out_flat[:B, :out_size]
    return out.reshape(B, future_window, -1)


def init_params(key, input_size, output_size):
    """Deterministic init mimicking torch.nn.Linear defaults (U(-1/sqrt(fan_in), ..))."""
    dims = [
        (input_size, input_size // 2),
        (input_size // 2, input_size // 2),
        (input_size // 2, input_size // 4),
        (input_size // 4, output_size),
    ]
    params = []
    for (fan_in, fan_out) in dims:
        key, kw, kb = jax.random.split(key, 3)
        bound = 1.0 / jnp.sqrt(jnp.float32(fan_in))
        w = jax.random.uniform(kw, (fan_in, fan_out), jnp.float32, -bound, bound)
        b = jax.random.uniform(kb, (1, fan_out), jnp.float32, -bound, bound)
        params.append((w, b))
    return params


def reference_forward(x, params, *, future_window):
    """Plain-JAX reference matching the kernel's numerics (bf16 dot, f32 acc)."""
    B = x.shape[0]
    h = x.reshape(B, -1).astype(jnp.float32)
    for (w, b) in params:
        h = jnp.dot(h.astype(jnp.bfloat16), w.astype(jnp.bfloat16),
                    preferred_element_type=jnp.float32) + b
        h = jnp.maximum(h, 0.0)
    return h.reshape(B, future_window, -1)


if __name__ == "__main__":
    # Small shapes consistent with the module's args:
    past_window, in_units = 8, 16      # input_size  = 128
    future_window, out_units = 8, 8    # output_size = 64
    batch = 2

    input_size = past_window * in_units
    output_size = future_window * out_units

    key = jax.random.PRNGKey(0)
    key, kx = jax.random.split(key)
    x = jax.random.normal(kx, (batch, past_window, in_units), jnp.float32)

    params = init_params(key, input_size, output_size)

    fwd = jax.jit(functools.partial(simple_dnn_forward,
                                    future_window=future_window))
    out = jax.block_until_ready(fwd(x, params))

    ref = reference_forward(x, params, future_window=future_window)
    assert out.shape == (batch, future_window, out_units), out.shape
    assert jnp.allclose(out, ref, atol=1e-3, rtol=1e-3), "mismatch vs reference"

    print("KERNEL_OK")
</pallas_src>

<mosaic_0001>
module attributes {stable_mosaic.version = 11 : i64} {
  func.func @_mlp_kernel(%arg0: i32, %arg1: memref<8x128xf32, #tpu.memory_space<vmem>>, %arg2: memref<128x64xbf16, #tpu.memory_space<vmem>>, %arg3: memref<1x64xf32, #tpu.memory_space<vmem>>, %arg4: memref<64x64xbf16, #tpu.memory_space<vmem>>, %arg5: memref<1x64xf32, #tpu.memory_space<vmem>>, %arg6: memref<64x32xbf16, #tpu.memory_space<vmem>>, %arg7: memref<1x32xf32, #tpu.memory_space<vmem>>, %arg8: memref<32x128xbf16, #tpu.memory_space<vmem>>, %arg9: memref<1x128xf32, #tpu.memory_space<vmem>>, %arg10: memref<8x128xf32, #tpu.memory_space<vmem>>) attributes {dimension_semantics = [#tpu.dimension_semantics<parallel>], iteration_bounds = array<i64: 1>, scalar_prefetch = 0 : i64, scratch_operands = 0 : i64, tpu.core_type = #tpu.core_type<tc>, window_params = [{transform_indices = @transform_0, window_bounds = array<i64: 8, 128>}, {pipeline_mode = #tpu.pipeline_mode<synchronous>, transform_indices = @transform_1, window_bounds = array<i64: 128, 64>}, {pipeline_mode = #tpu.pipeline_mode<synchronous>, transform_indices = @transform_2, window_bounds = array<i64: 1, 64>}, {pipeline_mode = #tpu.pipeline_mode<synchronous>, transform_indices = @transform_3, window_bounds = array<i64: 64, 64>}, {pipeline_mode = #tpu.pipeline_mode<synchronous>, transform_indices = @transform_4, window_bounds = array<i64: 1, 64>}, {pipeline_mode = #tpu.pipeline_mode<synchronous>, transform_indices = @transform_5, window_bounds = array<i64: 64, 32>}, {pipeline_mode = #tpu.pipeline_mode<synchronous>, transform_indices = @transform_6, window_bounds = array<i64: 1, 32>}, {pipeline_mode = #tpu.pipeline_mode<synchronous>, transform_indices = @transform_7, window_bounds = array<i64: 32, 128>}, {pipeline_mode = #tpu.pipeline_mode<synchronous>, transform_indices = @transform_8, window_bounds = array<i64: 1, 128>}, {transform_indices = @transform_9, window_bounds = array<i64: 8, 128>}]} {
    %c0 = arith.constant 0 : index
    %c0_0 = arith.constant 0 : index
    %0 = vector.load %arg3[%c0, %c0_0] : memref<1x64xf32, #tpu.memory_space<vmem>>, vector<1x64xf32>
    %c0_1 = arith.constant 0 : index
    %c0_2 = arith.constant 0 : index
    %1 = vector.load %arg5[%c0_1, %c0_2] : memref<1x64xf32, #tpu.memory_space<vmem>>, vector<1x64xf32>
    %c0_3 = arith.constant 0 : index
    %c0_4 = arith.constant 0 : index
    %2 = vector.load %arg7[%c0_3, %c0_4] : memref<1x32xf32, #tpu.memory_space<vmem>>, vector<1x32xf32>
    %c0_5 = arith.constant 0 : index
    %c0_6 = arith.constant 0 : index
    %3 = vector.load %arg9[%c0_5, %c0_6] : memref<1x128xf32, #tpu.memory_space<vmem>>, vector<1x128xf32>
    %c0_7 = arith.constant 0 : index
    %c0_8 = arith.constant 0 : index
    %4 = vector.load %arg1[%c0_7, %c0_8] : memref<8x128xf32, #tpu.memory_space<vmem>>, vector<8x128xf32>
    %5 = arith.truncf %4 : vector<8x128xf32> to vector<8x128xbf16>
    %c0_9 = arith.constant 0 : index
    %c0_10 = arith.constant 0 : index
    %6 = vector.load %arg2[%c0_9, %c0_10] : memref<128x64xbf16, #tpu.memory_space<vmem>>, vector<128x64xbf16>
    %cst = arith.constant dense<0.000000e+00> : vector<8x64xf32>
    %7 = tpu.matmul %5, %6, %cst {dimension_numbers = #tpu.dot_dimension_numbers<[1], [0], [0], [1], [0, 0, 1, 1], [], []>} : vector<8x128xbf16>, vector<128x64xbf16>, vector<8x64xf32> -> vector<8x64xf32>
    %8 = vector.broadcast %0 : vector<1x64xf32> to vector<8x64xf32>
    %9 = arith.addf %7, %8 : vector<8x64xf32>
    %cst_11 = arith.constant 0.000000e+00 : f32
    %10 = vector.broadcast %cst_11 : f32 to vector<8x64xf32>
    %11 = arith.maximumf %9, %10 : vector<8x64xf32>
    %12 = arith.truncf %11 : vector<8x64xf32> to vector<8x64xbf16>
    %c0_12 = arith.constant 0 : index
    %c0_13 = arith.constant 0 : index
    %13 = vector.load %arg4[%c0_12, %c0_13] : memref<64x64xbf16, #tpu.memory_space<vmem>>, vector<64x64xbf16>
    %cst_14 = arith.constant dense<0.000000e+00> : vector<8x64xf32>
    %14 = tpu.matmul %12, %13, %cst_14 {dimension_numbers = #tpu.dot_dimension_numbers<[1], [0], [0], [1], [0, 0, 1, 1], [], []>} : vector<8x64xbf16>, vector<64x64xbf16>, vector<8x64xf32> -> vector<8x64xf32>
    %15 = vector.broadcast %1 : vector<1x64xf32> to vector<8x64xf32>
    %16 = arith.addf %14, %15 : vector<8x64xf32>
    %cst_15 = arith.constant 0.000000e+00 : f32
    %17 = vector.broadcast %cst_15 : f32 to vector<8x64xf32>
    %18 = arith.maximumf %16, %17 : vector<8x64xf32>
    %19 = arith.truncf %18 : vector<8x64xf32> to vector<8x64xbf16>
    %c0_16 = arith.constant 0 : index
    %c0_17 = arith.constant 0 : index
    %20 = vector.load %arg6[%c0_16, %c0_17] : memref<64x32xbf16, #tpu.memory_space<vmem>>, vector<64x32xbf16>
    %cst_18 = arith.constant dense<0.000000e+00> : vector<8x32xf32>
    %21 = tpu.matmul %19, %20, %cst_18 {dimension_numbers = #tpu.dot_dimension_numbers<[1], [0], [0], [1], [0, 0, 1, 1], [], []>} : vector<8x64xbf16>, vector<64x32xbf16>, vector<8x32xf32> -> vector<8x32xf32>
    %22 = vector.broadcast %2 : vector<1x32xf32> to vector<8x32xf32>
    %23 = arith.addf %21, %22 : vector<8x32xf32>
    %cst_19 = arith.constant 0.000000e+00 : f32
    %24 = vector.broadcast %cst_19 : f32 to vector<8x32xf32>
    %25 = arith.maximumf %23, %24 : vector<8x32xf32>
    %26 = arith.truncf %25 : vector<8x32xf32> to vector<8x32xbf16>
    %c0_20 = arith.constant 0 : index
    %c0_21 = arith.constant 0 : index
    %27 = vector.load %arg8[%c0_20, %c0_21] : memref<32x128xbf16, #tpu.memory_space<vmem>>, vector<32x128xbf16>
    %cst_22 = arith.constant dense<0.000000e+00> : vector<8x128xf32>
    %28 = tpu.matmul %26, %27, %cst_22 {dimension_numbers = #tpu.dot_dimension_numbers<[1], [0], [0], [1], [0, 0, 1, 1], [], []>} : vector<8x32xbf16>, vector<32x128xbf16>, vector<8x128xf32> -> vector<8x128xf32>
    %29 = vector.broadcast %3 : vector<1x128xf32> to vector<8x128xf32>
    %30 = arith.addf %28, %29 : vector<8x128xf32>
    %cst_23 = arith.constant 0.000000e+00 : f32
    %31 = vector.broadcast %cst_23 : f32 to vector<8x128xf32>
    %32 = arith.maximumf %30, %31 : vector<8x128xf32>
    %c0_24 = arith.constant 0 : index
    %c0_25 = arith.constant 0 : index
    %33 = vector.load %arg10[%c0_24, %c0_25] : memref<8x128xf32, #tpu.memory_space<vmem>>, vector<8x128xf32>
    tpu.vector_store %arg10[%c0_24, %c0_25], %32 {strides = array<i32>} : memref<8x128xf32, #tpu.memory_space<vmem>>, vector<8x128xf32>,
    return
  }
  func.func @transform_0(%arg0: i32) -> (i32, i32) {
    %c0_i32 = arith.constant 0 : i32
    %c0_i32_0 = arith.constant 0 : i32
    return %arg0, %c0_i32 : i32, i32
  }
  func.func @transform_1(%arg0: i32) -> (i32, i32) {
    %c0_i32 = arith.constant 0 : i32
    %c0_i32_0 = arith.constant 0 : i32
    %c0_i32_1 = arith.constant 0 : i32
    return %c0_i32, %c0_i32_0 : i32, i32
  }
  func.func @transform_2(%arg0: i32) -> (i32, i32) {
    %c0_i32 = arith.constant 0 : i32
    %c0_i32_0 = arith.constant 0 : i32
    %c0_i32_1 = arith.constant 0 : i32
    return %c0_i32, %c0_i32_0 : i32, i32
  }
  func.func @transform_3(%arg0: i32) -> (i32, i32) {
    %c0_i32 = arith.constant 0 : i32
    %c0_i32_0 = arith.constant 0 : i32
    %c0_i32_1 = arith.constant 0 : i32
    return %c0_i32, %c0_i32_0 : i32, i32
  }
  func.func @transform_4(%arg0: i32) -> (i32, i32) {
    %c0_i32 = arith.constant 0 : i32
    %c0_i32_0 = arith.constant 0 : i32
    %c0_i32_1 = arith.constant 0 : i32
    return %c0_i32, %c0_i32_0 : i32, i32
  }
  func.func @transform_5(%arg0: i32) -> (i32, i32) {
    %c0_i32 = arith.constant 0 : i32
    %c0_i32_0 = arith.constant 0 : i32
    %c0_i32_1 = arith.constant 0 : i32
    return %c0_i32, %c0_i32_0 : i32, i32
  }
  func.func @transform_6(%arg0: i32) -> (i32, i32) {
    %c0_i32 = arith.constant 0 : i32
    %c0_i32_0 = arith.constant 0 : i32
    %c0_i32_1 = arith.constant 0 : i32
    return %c0_i32, %c0_i32_0 : i32, i32
  }
  func.func @transform_7(%arg0: i32) -> (i32, i32) {
    %c0_i32 = arith.constant 0 : i32
    %c0_i32_0 = arith.constant 0 : i32
    %c0_i32_1 = arith.constant 0 : i32
    return %c0_i32, %c0_i32_0 : i32, i32
  }
  func.func @transform_8(%arg0: i32) -> (i32, i32) {
    %c0_i32 = arith.constant 0 : i32
    %c0_i32_0 = arith.constant 0 : i32
    %c0_i32_1 = arith.constant 0 : i32
    return %c0_i32, %c0_i32_0 : i32, i32
  }
  func.func @transform_9(%arg0: i32) -> (i32, i32) {
    %c0_i32 = arith.constant 0 : i32
    %c0_i32_0 = arith.constant 0 : i32
    return %arg0, %c0_i32 : i32, i32
  }
}

</mosaic_0001>

<llo_original>
// kernel: simple_dnn_forward.1
$region0: #{simple_dnn_forward.1}
  #allocation0 [shape = 'u32[]', space=smem, size = 0x4, offset = 0x4, fixed_abs, tag = 'smem constant byte address 0x4 - core index']
  #allocation1 [shape = 'u32[144,128]{1,0:T(1,128)}', space=vmem, size = 0x12000, scoped, tag = 'internal scratch']
  %s0 = inlined_call_operand.vmem [shape: f32[8,128], index: 0, kind: input, shape index: {}]
  %s1 = inlined_call_operand.vmem [shape: bf16[128,64], index: 1, kind: input, shape index: {}]
  %s2 = inlined_call_operand.vmem [shape: f32[1,64], index: 2, kind: input, shape index: {}]
  %s3 = inlined_call_operand.vmem [shape: bf16[64,64], index: 3, kind: input, shape index: {}]
  %s4 = inlined_call_operand.vmem [shape: f32[1,64], index: 4, kind: input, shape index: {}]
  %s5 = inlined_call_operand.vmem [shape: bf16[64,32], index: 5, kind: input, shape index: {}]
  %s6 = inlined_call_operand.vmem [shape: f32[1,32], index: 6, kind: input, shape index: {}]
  %s7 = inlined_call_operand.vmem [shape: bf16[32,128], index: 7, kind: input, shape index: {}]
  %s8 = inlined_call_operand.vmem [shape: f32[1,128], index: 8, kind: input, shape index: {}]
  %s9 = inlined_call_operand.vmem [shape: f32[8,128], index: 9, kind: output, shape index: {}]
  %s10 = sld [smem:[#allocation0]]
  $region46: #{simple_dnn_forward.1} parent=0
    _
  %s12 = ssub.s32 1, %s10
  %s13 = scalar_select 0, %s12, %s10
  // Predicated region
  $region2: #{simple_dnn_forward.1} parent=0 // pred_check
    _
  $region3: #{simple_dnn_forward.1} parent=0 // pred_check_branch
    %15 = sbr.rel (0) target = $region5
  $region4: #{simple_dnn_forward.1} parent=0 // pred_region
    _
  $region5: #{simple_dnn_forward.1} parent=0 // pred_fallthru
    _
  // Predicated region
  $region6: #{simple_dnn_forward.1} parent=0 // pred_check
    _
  $region7: #{simple_dnn_forward.1} parent=0 // pred_check_branch
    %17 = sbr.rel (0) target = $region9
  $region8: #{simple_dnn_forward.1} parent=0 // pred_region
    _
  $region9: #{simple_dnn_forward.1} parent=0 // pred_fallthru
    _
  // Predicated region
  $region10: #{simple_dnn_forward.1} parent=0 // pred_check
    _
  $region11: #{simple_dnn_forward.1} parent=0 // pred_check_branch
    %19 = sbr.rel (0) target = $region13
  $region12: #{simple_dnn_forward.1} parent=0 // pred_region
    _
  $region13: #{simple_dnn_forward.1} parent=0 // pred_fallthru
    _
  // Predicated region
  $region14: #{simple_dnn_forward.1} parent=0 // pred_check
    _
  $region15: #{simple_dnn_forward.1} parent=0 // pred_check_branch
    %21 = sbr.rel (0) target = $region17
  $region16: #{simple_dnn_forward.1} parent=0 // pred_region
    _
  $region17: #{simple_dnn_forward.1} parent=0 // pred_fallthru
    _
  // Predicated region
  $region18: #{simple_dnn_forward.1} parent=0 // pred_check
    _
  $region19: #{simple_dnn_forward.1} parent=0 // pred_check_branch
    %23 = sbr.rel (0) target = $region21
  $region20: #{simple_dnn_forward.1} parent=0 // pred_region
    _
  $region21: #{simple_dnn_forward.1} parent=0 // pred_fallthru
    _
  // Predicated region
  $region22: #{simple_dnn_forward.1} parent=0 // pred_check
    _
  $region23: #{simple_dnn_forward.1} parent=0 // pred_check_branch
    %25 = sbr.rel (0) target = $region25
  $region24: #{simple_dnn_forward.1} parent=0 // pred_region
    _
  $region25: #{simple_dnn_forward.1} parent=0 // pred_fallthru
    _
  // Predicated region
  $region26: #{simple_dnn_forward.1} parent=0 // pred_check
    _
  $region27: #{simple_dnn_forward.1} parent=0 // pred_check_branch
    %27 = sbr.rel (0) target = $region29
  $region28: #{simple_dnn_forward.1} parent=0 // pred_region
    _
  $region29: #{simple_dnn_forward.1} parent=0 // pred_fallthru
    _
  // Predicated region
  $region30: #{simple_dnn_forward.1} parent=0 // pred_check
    _
  $region31: #{simple_dnn_forward.1} parent=0 // pred_check_branch
    %29 = sbr.rel (0) target = $region33
  $region32: #{simple_dnn_forward.1} parent=0 // pred_region
    _
  $region33: #{simple_dnn_forward.1} parent=0 // pred_fallthru
    _
  // Predicated region
  $region34: #{simple_dnn_forward.1} parent=0 // pred_check
    _
  $region35: #{simple_dnn_forward.1} parent=0 // pred_check_branch
    %31 = sbr.rel (0) target = $region37
  $region36: #{simple_dnn_forward.1} parent=0 // pred_region
    _
  $region37: #{simple_dnn_forward.1} parent=0 // pred_fallthru
    _
  %v33 = vld [vmem:[%s2] sm:$0x1]
  %v34 = vld [vmem:[%s4] sm:$0x1]
  %v35 = vld [vmem:[%s6] sm:$0x1]
  %v36 = vld [vmem:[%s8] sm:$0x1]
  %v37 = vld [vmem:[%s0] sm:$0xff]
  %v38 = vpack.c.bf16 %v37, %v37
  %v39 = vld [vmem:[%s1] sm:$0xf]
  %v40 = vld [vmem:[%s1 + $0x4] sm:$0xf]
  %v41 = vld [vmem:[%s1 + $0x8] sm:$0xf]
  %v42 = vld [vmem:[%s1 + $0xc] sm:$0xf]
  %v43 = vld [vmem:[%s1 + $0x10] sm:$0xf]
  %v44 = vld [vmem:[%s1 + $0x14] sm:$0xf]
  %v45 = vld [vmem:[%s1 + $0x18] sm:$0xf]
  %v46 = vld [vmem:[%s1 + $0x1c] sm:$0xf]
  %v47 = vld [vmem:[%s1 + $0x20] sm:$0xf]
  %v48 = vld [vmem:[%s1 + $0x24] sm:$0xf]
  %v49 = vld [vmem:[%s1 + $0x28] sm:$0xf]
  %v50 = vld [vmem:[%s1 + $0x2c] sm:$0xf]
  %v51 = vld [vmem:[%s1 + $0x30] sm:$0xf]
  %v52 = vld [vmem:[%s1 + $0x34] sm:$0xf]
  %v53 = vld [vmem:[%s1 + $0x38] sm:$0xf]
  %v54 = vld [vmem:[%s1 + $0x3c] sm:$0xf]
  %v56 = vlaneseq
  %v57 = vshrl.u32 %v56, 7
  %v58 = vsub.s32 0, %v57
  %v59 = vrot.slane %v33, %v58
  %v77 = vunpack.c.l.b16 %v39
  %v78 = vunpack.c.l.b16 %v40
  %v79 = vunpack.c.l.b16 %v41
  %v80 = vunpack.c.l.b16 %v42
  %v81 = vunpack.c.l.b16 %v43
  %v82 = vunpack.c.l.b16 %v44
  %v83 = vunpack.c.l.b16 %v45
  %v84 = vunpack.c.l.b16 %v46
  %v85 = vunpack.c.l.b16 %v47
  %v86 = vunpack.c.l.b16 %v48
  %v87 = vunpack.c.l.b16 %v49
  %v88 = vunpack.c.l.b16 %v50
  %v89 = vunpack.c.l.b16 %v51
  %v90 = vunpack.c.l.b16 %v52
  %v91 = vunpack.c.l.b16 %v53
  %v92 = vunpack.c.l.b16 %v54
  %v93 = vpack.c.b16 %v78, %v77
  %v94 = vpack.c.b16 %v80, %v79
  %v95 = vpack.c.b16 %v82, %v81
  %v96 = vpack.c.b16 %v84, %v83
  %v97 = vpack.c.b16 %v86, %v85
  %v98 = vpack.c.b16 %v88, %v87
  %v99 = vpack.c.b16 %v90, %v89
  %v100 = vpack.c.b16 %v92, %v91
  %109 = vmatprep.subr.bf16.mxu0 0
  %110 = vmatpush1.bf16.msra.mxu0 %v93
  %111 = vmatprep.subr.bf16.mxu0 0
  %112 = vmatpush1.bf16.msra.mxu0 %v94
  %113 = vmatprep.subr.bf16.mxu0 0
  %114 = vmatpush1.bf16.msra.mxu0 %v95
  %115 = vmatprep.subr.bf16.mxu0 0
  %116 = vmatpush1.bf16.msra.mxu0 %v96
  %117 = vmatprep.subr.bf16.mxu0 0
  %118 = vmatpush1.bf16.msra.mxu0 %v97
  %119 = vmatprep.subr.bf16.mxu0 0
  %120 = vmatpush1.bf16.msra.mxu0 %v98
  %121 = vmatprep.subr.bf16.mxu0 0
  %122 = vmatpush1.bf16.msra.mxu0 %v99
  %123 = vmatprep.subr.bf16.mxu0 0
  %124 = vmatpush1.bf16.msra.mxu0 %v100
  %125 = vmatprep.subr.bf16.mxu0 0
  %126 = vmatpush1.bf16.msra.mxu0 0
  %127 = vmatprep.subr.bf16.mxu0 0
  %128 = vmatpush1.bf16.msra.mxu0 0
  %129 = vmatprep.subr.bf16.mxu0 0
  %130 = vmatpush1.bf16.msra.mxu0 0
  %131 = vmatprep.subr.bf16.mxu0 0
  %132 = vmatpush1.bf16.msra.mxu0 0
  %133 = vmatprep.subr.bf16.mxu0 0
  %134 = vmatpush1.bf16.msra.mxu0 0
  %135 = vmatprep.subr.bf16.mxu0 0
  %136 = vmatpush1.bf16.msra.mxu0 0
  %137 = vmatprep.subr.bf16.mxu0 0
  %138 = vmatpush1.bf16.msra.mxu0 0
  %139 = vmatprep.subr.bf16.mxu0 0
  %140 = vmatpush1.bf16.msra.mxu0 0
  %141 = vmatprep.mubr.bf16.mxu0 0
  %142 = vmatmul.mubr.bf16.gmra.mrb[0].mxu0 %v38
  %v143 = vpop.f32.mrb[0].mxu0
  %v144 = vadd.f32 %v59, %v143
  %v145 = vpop.f32.mrb[0].mxu0
  %v146 = vpop.f32.mrb[0].mxu0
  %v147 = vpop.f32.mrb[0].mxu0
  %148 = vdwg.mxu0
  %v149 = vmax.f32 %v144, 0.0
  %v150 = vpack.c.bf16 %v149, %v149
  %v151 = vld [vmem:[%s3] sm:$0xf]
  %v152 = vld [vmem:[%s3 + $0x4] sm:$0xf]
  %v153 = vld [vmem:[%s3 + $0x8] sm:$0xf]
  %v154 = vld [vmem:[%s3 + $0xc] sm:$0xf]
  %v155 = vld [vmem:[%s3 + $0x10] sm:$0xf]
  %v156 = vld [vmem:[%s3 + $0x14] sm:$0xf]
  %v157 = vld [vmem:[%s3 + $0x18] sm:$0xf]
  %v158 = vld [vmem:[%s3 + $0x1c] sm:$0xf]
  %v160 = vlaneseq
  %v161 = vshrl.u32 %v160, 7
  %v162 = vsub.s32 0, %v161
  %v163 = vrot.slane %v34, %v162
  %v173 = vunpack.c.l.b16 %v151
  %v174 = vunpack.c.l.b16 %v152
  %v175 = vunpack.c.l.b16 %v153
  %v176 = vunpack.c.l.b16 %v154
  %v177 = vunpack.c.l.b16 %v155
  %v178 = vunpack.c.l.b16 %v156
  %v179 = vunpack.c.l.b16 %v157
  %v180 = vunpack.c.l.b16 %v158
  %v181 = vpack.c.b16 %v174, %v173
  %v182 = vpack.c.b16 %v176, %v175
  %v183 = vpack.c.b16 %v178, %v177
  %v184 = vpack.c.b16 %v180, %v179
  %vm189 = vcmask 523264
  %v191 = vsel %vm189, %v150, 0
  %193 = vmatprep.subr.bf16.mxu0 0
  %194 = vmatpush1.bf16.msra.mxu0 %v181
  %195 = vmatprep.subr.bf16.mxu0 0
  %196 = vmatpush1.bf16.msra.mxu0 %v182
  %197 = vmatprep.subr.bf16.mxu0 0
  %198 = vmatpush1.bf16.msra.mxu0 %v183
  %199 = vmatprep.subr.bf16.mxu0 0
  %200 = vmatpush1.bf16.msra.mxu0 %v184
  %201 = vmatprep.subr.bf16.mxu0 0
  %202 = vmatpush1.bf16.msra.mxu0 0
  %203 = vmatprep.subr.bf16.mxu0 0
  %204 = vmatpush1.bf16.msra.mxu0 0
  %205 = vmatprep.subr.bf16.mxu0 0
  %206 = vmatpush1.bf16.msra.mxu0 0
  %207 = vmatprep.subr.bf16.mxu0 0
  %208 = vmatpush1.bf16.msra.mxu0 0
  %209 = vmatprep.subr.bf16.mxu0 0
  %210 = vmatpush1.bf16.msra.mxu0 0
  %211 = vmatprep.subr.bf16.mxu0 0
  %212 = vmatpush1.bf16.msra.mxu0 0
  %213 = vmatprep.subr.bf16.mxu0 0
  %214 = vmatpush1.bf16.msra.mxu0 0
  %215 = vmatprep.subr.bf16.mxu0 0
  %216 = vmatpush1.bf16.msra.mxu0 0
  %217 = vmatprep.subr.bf16.mxu0 0
  %218 = vmatpush1.bf16.msra.mxu0 0
  %219 = vmatprep.subr.bf16.mxu0 0
  %220 = vmatpush1.bf16.msra.mxu0 0
  %221 = vmatprep.subr.bf16.mxu0 0
  %222 = vmatpush1.bf16.msra.mxu0 0
  %223 = vmatprep.subr.bf16.mxu0 0
  %224 = vmatpush1.bf16.msra.mxu0 0
  %225 = vmatprep.mubr.bf16.mxu0 0
  %226 = vmatmul.mubr.bf16.gmra.mrb[0].mxu0 %v191
  %v227 = vpop.f32.mrb[0].mxu0
  %v228 = vadd.f32 %v163, %v227
  %v229 = vpop.f32.mrb[0].mxu0
  %v230 = vpop.f32.mrb[0].mxu0
  %v231 = vpop.f32.mrb[0].mxu0
  %232 = vdwg.mxu0
  %v233 = vmax.f32 %v228, 0.0
  %v234 = vpack.c.bf16 %v233, %v233
  %v235 = vld [vmem:[%s5] sm:$0xf]
  %v236 = vld [vmem:[%s5 + $0x4] sm:$0xf]
  %v237 = vld [vmem:[%s5 + $0x8] sm:$0xf]
  %v238 = vld [vmem:[%s5 + $0xc] sm:$0xf]
  %v239 = vld [vmem:[%s5 + $0x10] sm:$0xf]
  %v240 = vld [vmem:[%s5 + $0x14] sm:$0xf]
  %v241 = vld [vmem:[%s5 + $0x18] sm:$0xf]
  %v242 = vld [vmem:[%s5 + $0x1c] sm:$0xf]
  %v244 = vlaneseq
  %v245 = vshrl.u32 %v244, 7
  %v246 = vsub.s32 0, %v245
  %v247 = vrot.slane %v35, %v246
  %v257 = vunpack.c.l.b16 %v235
  %v258 = vunpack.c.l.b16 %v236
  %v259 = vunpack.c.l.b16 %v237
  %v260 = vunpack.c.l.b16 %v238
  %v261 = vunpack.c.l.b16 %v239
  %v262 = vunpack.c.l.b16 %v240
  %v263 = vunpack.c.l.b16 %v241
  %v264 = vunpack.c.l.b16 %v242
  %v265 = vpack.c.b16 %v258, %v257
  %v266 = vpack.c.b16 %v260, %v259
  %v267 = vpack.c.b16 %v262, %v261
  %v268 = vpack.c.b16 %v264, %v263
  %v274 = vsel %vm189, %v234, 0
  %276 = vmatprep.subr.bf16.mxu0 0
  %277 = vmatpush1.bf16.msra.mxu0 %v265
  %278 = vmatprep.subr.bf16.mxu0 0
  %279 = vmatpush1.bf16.msra.mxu0 %v266
  %280 = vmatprep.subr.bf16.mxu0 0
  %281 = vmatpush1.bf16.msra.mxu0 %v267
  %282 = vmatprep.subr.bf16.mxu0 0
  %283 = vmatpush1.bf16.msra.mxu0 %v268
  %284 = vmatprep.subr.bf16.mxu0 0
  %285 = vmatpush1.bf16.msra.mxu0 0
  %286 = vmatprep.subr.bf16.mxu0 0
  %287 = vmatpush1.bf16.msra.mxu0 0
  %288 = vmatprep.subr.bf16.mxu0 0
  %289 = vmatpush1.bf16.msra.mxu0 0
  %290 = vmatprep.subr.bf16.mxu0 0
  %291 = vmatpush1.bf16.msra.mxu0 0
  %292 = vmatprep.subr.bf16.mxu0 0
  %293 = vmatpush1.bf16.msra.mxu0 0
  %294 = vmatprep.subr.bf16.mxu0 0
  %295 = vmatpush1.bf16.msra.mxu0 0
  %296 = vmatprep.subr.bf16.mxu0 0
  %297 = vmatpush1.bf16.msra.mxu0 0
  %298 = vmatprep.subr.bf16.mxu0 0
  %299 = vmatpush1.bf16.msra.mxu0 0
  %300 = vmatprep.subr.bf16.mxu0 0
  %301 = vmatpush1.bf16.msra.mxu0 0
  %302 = vmatprep.subr.bf16.mxu0 0
  %303 = vmatpush1.bf16.msra.mxu0 0
  %304 = vmatprep.subr.bf16.mxu0 0
  %305 = vmatpush1.bf16.msra.mxu0 0
  %306 = vmatprep.subr.bf16.mxu0 0
  %307 = vmatpush1.bf16.msra.mxu0 0
  %308 = vmatprep.mubr.bf16.mxu0 0
  %309 = vmatmul.mubr.bf16.gmra.mrb[0].mxu0 %v274
  %v310 = vpop.f32.mrb[0].mxu0
  %v311 = vadd.f32 %v247, %v310
  %v312 = vpop.f32.mrb[0].mxu0
  %v313 = vpop.f32.mrb[0].mxu0
  %v314 = vpop.f32.mrb[0].mxu0
  %315 = vdwg.mxu0
  %v316 = vmax.f32 %v311, 0.0
  %v317 = vpack.c.bf16 %v316, %v316
  %v318 = vld [vmem:[%s7] sm:$0xf]
  %v319 = vld [vmem:[%s7 + $0x4] sm:$0xf]
  %v320 = vld [vmem:[%s7 + $0x8] sm:$0xf]
  %v321 = vld [vmem:[%s7 + $0xc] sm:$0xf]
  %v323 = vlaneseq
  %v324 = vshrl.u32 %v323, 7
  %v325 = vsub.s32 0, %v324
  %v326 = vrot.slane %v36, %v325
  %v332 = vunpack.c.l.b16 %v318
  %v333 = vunpack.c.l.b16 %v319
  %v334 = vunpack.c.l.b16 %v320
  %v335 = vunpack.c.l.b16 %v321
  %v336 = vpack.c.b16 %v333, %v332
  %v337 = vpack.c.b16 %v335, %v334
  %vm340 = vcmask 261120
  %v342 = vsel %vm340, %v317, 0
  %344 = vmatprep.subr.bf16.mxu0 0
  %345 = vmatpush1.bf16.msra.mxu0 %v336
  %346 = vmatprep.subr.bf16.mxu0 0
  %347 = vmatpush1.bf16.msra.mxu0 %v337
  %348 = vmatprep.subr.bf16.mxu0 0
  %349 = vmatpush1.bf16.msra.mxu0 0
  %350 = vmatprep.subr.bf16.mxu0 0
  %351 = vmatpush1.bf16.msra.mxu0 0
  %352 = vmatprep.subr.bf16.mxu0 0
  %353 = vmatpush1.bf16.msra.mxu0 0
  %354 = vmatprep.subr.bf16.mxu0 0
  %355 = vmatpush1.bf16.msra.mxu0 0
  %356 = vmatprep.subr.bf16.mxu0 0
  %357 = vmatpush1.bf16.msra.mxu0 0
  %358 = vmatprep.subr.bf16.mxu0 0
  %359 = vmatpush1.bf16.msra.mxu0 0
  %360 = vmatprep.subr.bf16.mxu0 0
  %361 = vmatpush1.bf16.msra.mxu0 0
  %362 = vmatprep.subr.bf16.mxu0 0
  %363 = vmatpush1.bf16.msra.mxu0 0
  %364 = vmatprep.subr.bf16.mxu0 0
  %365 = vmatpush1.bf16.msra.mxu0 0
  %366 = vmatprep.subr.bf16.mxu0 0
  %367 = vmatpush1.bf16.msra.mxu0 0
  %368 = vmatprep.subr.bf16.mxu0 0
  %369 = vmatpush1.bf16.msra.mxu0 0
  %370 = vmatprep.subr.bf16.mxu0 0
  %371 = vmatpush1.bf16.msra.mxu0 0
  %372 = vmatprep.subr.bf16.mxu0 0
  %373 = vmatpush1.bf16.msra.mxu0 0
  %374 = vmatprep.subr.bf16.mxu0 0
  %375 = vmatpush1.bf16.msra.mxu0 0
  %376 = vmatprep.mubr.bf16.mxu0 0
  %377 = vmatmul.mubr.bf16.gmra.mrb[0].mxu0 %v342
  %v378 = vpop.f32.mrb[0].mxu0
  %v379 = vadd.f32 %v326, %v378
  %v380 = vpop.f32.mrb[0].mxu0
  %v381 = vpop.f32.mrb[0].mxu0
  %v382 = vpop.f32.mrb[0].mxu0
  %383 = vdwg.mxu0
  %v384 = vmax.f32 %v379, 0.0
  %385 = vst [vmem:[%s9] sm:$0xff] %v384
  // Predicated region
  $region38: #{simple_dnn_forward.1} parent=0 // pred_check
    _
  $region39: #{simple_dnn_forward.1} parent=0 // pred_check_branch
    %387 = sbr.rel (0) target = $region41
  $region40: #{simple_dnn_forward.1} parent=0 // pred_region
    _
  $region41: #{simple_dnn_forward.1} parent=0 // pred_fallthru
    _
  // Predicated region
  $region42: #{simple_dnn_forward.1} parent=0 // pred_check
    _
  $region43: #{simple_dnn_forward.1} parent=0 // pred_check_branch
    %389 = sbr.rel (0) target = $region45
  $region44: #{simple_dnn_forward.1} parent=0 // pred_region
    _
  $region45: #{simple_dnn_forward.1} parent=0 // pred_fallthru
    _

</llo_original>
